<compile_context>
chip_gen: v6e
topology: v6e:2x2x1
jax: 0.10.0
libtpu: 0.0.40
codegen_flags: <defaults>
</compile_context>

<pallas_src>
import math

import jax
import jax.numpy as jnp
from jax import lax
from jax.experimental import pallas as pl
from jax.experimental.pallas import tpu as pltpu

# ---------------- config (small, consistent with the module) ----------------
B = 2            # batch
S = 8            # sequence length
E = 32           # ninp (embedding dim)
V = 128          # ntoken (vocab size)
PE_LEN = 16      # rows of the sinusoidal table we materialize (reference uses
                 # max_len=5000; forward only reads rows [0, S-2)).

VMEM = pltpu.MemorySpace.VMEM
_SCALE = math.sqrt(float(E))     # python float -> inlined literal, not captured


# ---------------- kernel ----------------
def encoder_kernel(ids_ref, emb_ref, src_ref, onehot_ref):
    """Embedding lookup as (scaled one-hot) @ weight on the MXU.

    ids_ref:    [B*S]     int32  SMEM (scalar-prefetched token ids)
    emb_ref:    [V, E]    f32    VMEM embedding weight
    src_ref:    [B*S, E]  f32    VMEM out: embedding(ids) * sqrt(E)
    onehot_ref: [B*S, V]  f32    VMEM scratch (scaled one-hot rows)
    """
    lane_iota = lax.broadcasted_iota(jnp.int32, (1, V), 1)         # [1, V]
    # Build the scaled one-hot row-by-row from SMEM scalars (B*S = 16 rows,
    # statically unrolled).  sqrt(E) is folded in here, so the MXU result is
    # stored directly with no VPU epilogue.
    for r in range(B * S):
        tok = ids_ref[r]                                           # SMEM scalar
        onehot_ref[r:r + 1, :] = jnp.where(lane_iota == tok, _SCALE, 0.0)
    # [B*S, V] @ [V, E]; K = V = 128 is one aligned MXU pass.
    src_ref[...] = jnp.dot(onehot_ref[...], emb_ref[...],
                           precision=lax.Precision.HIGHEST,
                           preferred_element_type=jnp.float32)


# ---------------- wrapper ----------------
def _encoder_pallas(ids_flat, emb_w):
    grid_spec = pltpu.PrefetchScalarGridSpec(
        num_scalar_prefetch=1,                 # ids -> SMEM, no vector load
        grid=(1,),
        in_specs=[pl.BlockSpec(memory_space=VMEM)],     # emb_w, whole array
        out_specs=pl.BlockSpec(memory_space=VMEM),      # src (flat)
        scratch_shapes=[pltpu.VMEM((B * S, V), jnp.float32)],
    )
    return pl.pallas_call(
        encoder_kernel,
        out_shape=jax.ShapeDtypeStruct((B * S, E), jnp.float32),
        grid_spec=grid_spec,
        compiler_params=pltpu.CompilerParams(
            dimension_semantics=("arbitrary",)),
        cost_estimate=pl.CostEstimate(
            flops=2 * (B * S) * V * E,
            transcendentals=0,
            bytes_accessed=(B * S) * 4 + V * E * 4 + (B * S) * E * 4),
    )(ids_flat, emb_w)


@jax.jit
def encoder_forward(params, input_ids):
    """Returns (module output [1, S, E], scaled embedding src [B, S, E])."""
    ids_flat = input_ids.reshape(B * S).astype(jnp.int32)   # layout plumbing
    src_flat = _encoder_pallas(ids_flat, params["emb_w"])
    # Positional path is input-independent: pos_table = cat(begin_emb, pe),
    # so cat(begin_emb, pe[:S-2]) == pos_table[:S].  Dropout is identity in
    # eval mode.  Done outside the kernel per the perf review.
    pos = params["pos_table"][:S][None, :, :]
    return pos, src_flat.reshape(B, S, E)


# ---------------- parameters / buffers ----------------
def build_pe(max_len, d_model):
    """Sinusoidal table, exactly as in PositionalEncoding.__init__."""
    position = jnp.arange(max_len, dtype=jnp.float32)[:, None]
    div_term = jnp.exp(jnp.arange(0, d_model, 2, dtype=jnp.float32)
                       * (-math.log(10000.0) / d_model))
    ang = position * div_term                                   # [max_len, E/2]
    pe = jnp.zeros((max_len, d_model), jnp.float32)
    pe = pe.at[:, 0::2].set(jnp.sin(ang))
    pe = pe.at[:, 1::2].set(jnp.cos(ang))
    return pe


def init_params(key):
    initrange = 0.1                                             # Encoder.init_weights
    emb_w = jax.random.uniform(key, (V, E), jnp.float32, -initrange, initrange)
    begin_emb = jnp.zeros((2, E), jnp.float32)                  # registered buffer
    pe = build_pe(PE_LEN, E)                                    # registered buffer
    pos_table = jnp.concatenate([begin_emb, pe], axis=0)        # [2+PE_LEN, E]
    assert pos_table.shape[0] >= S, "PE_LEN too small for seq length"
    return {
        "emb_w": emb_w,
        "begin_emb": begin_emb,
        "pe": pe,
        "pos_table": pos_table,
    }


# ---------------- demo / self-check ----------------
if __name__ == "__main__":
    key = jax.random.PRNGKey(0)
    wkey, ikey = jax.random.split(key)
    params = init_params(wkey)
    input_ids = jax.random.randint(ikey, (B, S), 0, V, dtype=jnp.int32)

    pos_out, src = encoder_forward(params, input_ids)
    pos_out, src = jax.block_until_ready((pos_out, src))

    # shape checks
    assert pos_out.shape == (1, S, E), pos_out.shape
    assert src.shape == (B, S, E), src.shape

    # numerical check against a pure-JAX reference of the same forward
    ref_src = jnp.take(params["emb_w"], input_ids, axis=0) * math.sqrt(float(E))
    ref_pos = jnp.concatenate([params["begin_emb"], params["pe"][:S - 2]],
                              axis=0)[None]
    assert jnp.allclose(src, ref_src, atol=1e-5), "embedding path mismatch"
    assert jnp.allclose(pos_out, ref_pos, atol=1e-6), "positional path mismatch"
    assert bool(jnp.all(jnp.isfinite(pos_out))) and bool(jnp.all(jnp.isfinite(src)))

    print("KERNEL_OK")
</pallas_src>

<mosaic_0001>
module attributes {stable_mosaic.version = 11 : i64} {
  func.func @encoder_kernel(%arg0: i32, %arg1: memref<16xi32, #tpu.memory_space<smem>>, %arg2: memref<128x32xf32, #tpu.memory_space<vmem>>, %arg3: memref<16x32xf32, #tpu.memory_space<vmem>>, %arg4: memref<16x128xf32, #tpu.memory_space<vmem>>) attributes {dimension_semantics = [#tpu.dimension_semantics<arbitrary>], iteration_bounds = array<i64: 1>, scalar_prefetch = 1 : i64, scratch_operands = 1 : i64, tpu.core_type = #tpu.core_type<tc>, window_params = [{pipeline_mode = #tpu.pipeline_mode<synchronous>, transform_indices = @transform_0, window_bounds = array<i64: 128, 32>}, {pipeline_mode = #tpu.pipeline_mode<synchronous>, transform_indices = @transform_1, window_bounds = array<i64: 16, 32>}]} {
    %0 = tpu.iota {dimensions = array<i32: 1>} : vector<1x128xi32>
    %c0 = arith.constant 0 : index
    %1 = memref.load %arg1[%c0] : memref<16xi32, #tpu.memory_space<smem>>
    %2 = vector.broadcast %1 : i32 to vector<1x128xi32>
    %3 = arith.cmpi eq, %0, %2 : vector<1x128xi32>
    %cst = arith.constant 5.65685415 : f32
    %cst_0 = arith.constant 0.000000e+00 : f32
    %4 = vector.broadcast %cst : f32 to vector<1x128xf32>
    %5 = vector.broadcast %cst_0 : f32 to vector<1x128xf32>
    %6 = arith.select %3, %4, %5 : vector<1x128xi1>, vector<1x128xf32>
    %c0_1 = arith.constant 0 : index
    %c0_2 = arith.constant 0 : index
    %7 = vector.load %arg4[%c0_1, %c0_2] : memref<16x128xf32, #tpu.memory_space<vmem>>, vector<1x128xf32>
    tpu.vector_store %arg4[%c0_1, %c0_2], %6 {strides = array<i32>} : memref<16x128xf32, #tpu.memory_space<vmem>>, vector<1x128xf32>,
    %c1 = arith.constant 1 : index
    %8 = memref.load %arg1[%c1] : memref<16xi32, #tpu.memory_space<smem>>
    %9 = vector.broadcast %8 : i32 to vector<1x128xi32>
    %10 = arith.cmpi eq, %0, %9 : vector<1x128xi32>
    %cst_3 = arith.constant 5.65685415 : f32
    %cst_4 = arith.constant 0.000000e+00 : f32
    %11 = vector.broadcast %cst_3 : f32 to vector<1x128xf32>
    %12 = vector.broadcast %cst_4 : f32 to vector<1x128xf32>
    %13 = arith.select %10, %11, %12 : vector<1x128xi1>, vector<1x128xf32>
    %c1_5 = arith.constant 1 : index
    %c0_6 = arith.constant 0 : index
    %14 = vector.load %arg4[%c1_5, %c0_6] : memref<16x128xf32, #tpu.memory_space<vmem>>, vector<1x128xf32>
    tpu.vector_store %arg4[%c1_5, %c0_6], %13 {strides = array<i32>} : memref<16x128xf32, #tpu.memory_space<vmem>>, vector<1x128xf32>,
    %c2 = arith.constant 2 : index
    %15 = memref.load %arg1[%c2] : memref<16xi32, #tpu.memory_space<smem>>
    %16 = vector.broadcast %15 : i32 to vector<1x128xi32>
    %17 = arith.cmpi eq, %0, %16 : vector<1x128xi32>
    %cst_7 = arith.constant 5.65685415 : f32
    %cst_8 = arith.constant 0.000000e+00 : f32
    %18 = vector.broadcast %cst_7 : f32 to vector<1x128xf32>
    %19 = vector.broadcast %cst_8 : f32 to vector<1x128xf32>
    %20 = arith.select %17, %18, %19 : vector<1x128xi1>, vector<1x128xf32>
    %c2_9 = arith.constant 2 : index
    %c0_10 = arith.constant 0 : index
    %21 = vector.load %arg4[%c2_9, %c0_10] : memref<16x128xf32, #tpu.memory_space<vmem>>, vector<1x128xf32>
    tpu.vector_store %arg4[%c2_9, %c0_10], %20 {strides = array<i32>} : memref<16x128xf32, #tpu.memory_space<vmem>>, vector<1x128xf32>,
    %c3 = arith.constant 3 : index
    %22 = memref.load %arg1[%c3] : memref<16xi32, #tpu.memory_space<smem>>
    %23 = vector.broadcast %22 : i32 to vector<1x128xi32>
    %24 = arith.cmpi eq, %0, %23 : vector<1x128xi32>
    %cst_11 = arith.constant 5.65685415 : f32
    %cst_12 = arith.constant 0.000000e+00 : f32
    %25 = vector.broadcast %cst_11 : f32 to vector<1x128xf32>
    %26 = vector.broadcast %cst_12 : f32 to vector<1x128xf32>
    %27 = arith.select %24, %25, %26 : vector<1x128xi1>, vector<1x128xf32>
    %c3_13 = arith.constant 3 : index
    %c0_14 = arith.constant 0 : index
    %28 = vector.load %arg4[%c3_13, %c0_14] : memref<16x128xf32, #tpu.memory_space<vmem>>, vector<1x128xf32>
    tpu.vector_store %arg4[%c3_13, %c0_14], %27 {strides = array<i32>} : memref<16x128xf32, #tpu.memory_space<vmem>>, vector<1x128xf32>,
    %c4 = arith.constant 4 : index
    %29 = memref.load %arg1[%c4] : memref<16xi32, #tpu.memory_space<smem>>
    %30 = vector.broadcast %29 : i32 to vector<1x128xi32>
    %31 = arith.cmpi eq, %0, %30 : vector<1x128xi32>
    %cst_15 = arith.constant 5.65685415 : f32
    %cst_16 = arith.constant 0.000000e+00 : f32
    %32 = vector.broadcast %cst_15 : f32 to vector<1x128xf32>
    %33 = vector.broadcast %cst_16 : f32 to vector<1x128xf32>
    %34 = arith.select %31, %32, %33 : vector<1x128xi1>, vector<1x128xf32>
    %c4_17 = arith.constant 4 : index
    %c0_18 = arith.constant 0 : index
    %35 = vector.load %arg4[%c4_17, %c0_18] : memref<16x128xf32, #tpu.memory_space<vmem>>, vector<1x128xf32>
    tpu.vector_store %arg4[%c4_17, %c0_18], %34 {strides = array<i32>} : memref<16x128xf32, #tpu.memory_space<vmem>>, vector<1x128xf32>,
    %c5 = arith.constant 5 : index
    %36 = memref.load %arg1[%c5] : memref<16xi32, #tpu.memory_space<smem>>
    %37 = vector.broadcast %36 : i32 to vector<1x128xi32>
    %38 = arith.cmpi eq, %0, %37 : vector<1x128xi32>
    %cst_19 = arith.constant 5.65685415 : f32
    %cst_20 = arith.constant 0.000000e+00 : f32
    %39 = vector.broadcast %cst_19 : f32 to vector<1x128xf32>
    %40 = vector.broadcast %cst_20 : f32 to vector<1x128xf32>
    %41 = arith.select %38, %39, %40 : vector<1x128xi1>, vector<1x128xf32>
    %c5_21 = arith.constant 5 : index
    %c0_22 = arith.constant 0 : index
    %42 = vector.load %arg4[%c5_21, %c0_22] : memref<16x128xf32, #tpu.memory_space<vmem>>, vector<1x128xf32>
    tpu.vector_store %arg4[%c5_21, %c0_22], %41 {strides = array<i32>} : memref<16x128xf32, #tpu.memory_space<vmem>>, vector<1x128xf32>,
    %c6 = arith.constant 6 : index
    %43 = memref.load %arg1[%c6] : memref<16xi32, #tpu.memory_space<smem>>
    %44 = vector.broadcast %43 : i32 to vector<1x128xi32>
    %45 = arith.cmpi eq, %0, %44 : vector<1x128xi32>
    %cst_23 = arith.constant 5.65685415 : f32
    %cst_24 = arith.constant 0.000000e+00 : f32
    %46 = vector.broadcast %cst_23 : f32 to vector<1x128xf32>
    %47 = vector.broadcast %cst_24 : f32 to vector<1x128xf32>
    %48 = arith.select %45, %46, %47 : vector<1x128xi1>, vector<1x128xf32>
    %c6_25 = arith.constant 6 : index
    %c0_26 = arith.constant 0 : index
    %49 = vector.load %arg4[%c6_25, %c0_26] : memref<16x128xf32, #tpu.memory_space<vmem>>, vector<1x128xf32>
    tpu.vector_store %arg4[%c6_25, %c0_26], %48 {strides = array<i32>} : memref<16x128xf32, #tpu.memory_space<vmem>>, vector<1x128xf32>,
    %c7 = arith.constant 7 : index
    %50 = memref.load %arg1[%c7] : memref<16xi32, #tpu.memory_space<smem>>
    %51 = vector.broadcast %50 : i32 to vector<1x128xi32>
    %52 = arith.cmpi eq, %0, %51 : vector<1x128xi32>
    %cst_27 = arith.constant 5.65685415 : f32
    %cst_28 = arith.constant 0.000000e+00 : f32
    %53 = vector.broadcast %cst_27 : f32 to vector<1x128xf32>
    %54 = vector.broadcast %cst_28 : f32 to vector<1x128xf32>
    %55 = arith.select %52, %53, %54 : vector<1x128xi1>, vector<1x128xf32>
    %c7_29 = arith.constant 7 : index
    %c0_30 = arith.constant 0 : index
    %56 = vector.load %arg4[%c7_29, %c0_30] : memref<16x128xf32, #tpu.memory_space<vmem>>, vector<1x128xf32>
    tpu.vector_store %arg4[%c7_29, %c0_30], %55 {strides = array<i32>} : memref<16x128xf32, #tpu.memory_space<vmem>>, vector<1x128xf32>,
    %c8 = arith.constant 8 : index
    %57 = memref.load %arg1[%c8] : memref<16xi32, #tpu.memory_space<smem>>
    %58 = vector.broadcast %57 : i32 to vector<1x128xi32>
    %59 = arith.cmpi eq, %0, %58 : vector<1x128xi32>
    %cst_31 = arith.constant 5.65685415 : f32
    %cst_32 = arith.constant 0.000000e+00 : f32
    %60 = vector.broadcast %cst_31 : f32 to vector<1x128xf32>
    %61 = vector.broadcast %cst_32 : f32 to vector<1x128xf32>
    %62 = arith.select %59, %60, %61 : vector<1x128xi1>, vector<1x128xf32>
    %c8_33 = arith.constant 8 : index
    %c0_34 = arith.constant 0 : index
    %63 = vector.load %arg4[%c8_33, %c0_34] : memref<16x128xf32, #tpu.memory_space<vmem>>, vector<1x128xf32>
    tpu.vector_store %arg4[%c8_33, %c0_34], %62 {strides = array<i32>} : memref<16x128xf32, #tpu.memory_space<vmem>>, vector<1x128xf32>,
    %c9 = arith.constant 9 : index
    %64 = memref.load %arg1[%c9] : memref<16xi32, #tpu.memory_space<smem>>
    %65 = vector.broadcast %64 : i32 to vector<1x128xi32>
    %66 = arith.cmpi eq, %0, %65 : vector<1x128xi32>
    %cst_35 = arith.constant 5.65685415 : f32
    %cst_36 = arith.constant 0.000000e+00 : f32
    %67 = vector.broadcast %cst_35 : f32 to vector<1x128xf32>
    %68 = vector.broadcast %cst_36 : f32 to vector<1x128xf32>
    %69 = arith.select %66, %67, %68 : vector<1x128xi1>, vector<1x128xf32>
    %c9_37 = arith.constant 9 : index
    %c0_38 = arith.constant 0 : index
    %70 = vector.load %arg4[%c9_37, %c0_38] : memref<16x128xf32, #tpu.memory_space<vmem>>, vector<1x128xf32>
    tpu.vector_store %arg4[%c9_37, %c0_38], %69 {strides = array<i32>} : memref<16x128xf32, #tpu.memory_space<vmem>>, vector<1x128xf32>,
    %c10 = arith.constant 10 : index
    %71 = memref.load %arg1[%c10] : memref<16xi32, #tpu.memory_space<smem>>
    %72 = vector.broadcast %71 : i32 to vector<1x128xi32>
    %73 = arith.cmpi eq, %0, %72 : vector<1x128xi32>
    %cst_39 = arith.constant 5.65685415 : f32
    %cst_40 = arith.constant 0.000000e+00 : f32
    %74 = vector.broadcast %cst_39 : f32 to vector<1x128xf32>
    %75 = vector.broadcast %cst_40 : f32 to vector<1x128xf32>
    %76 = arith.select %73, %74, %75 : vector<1x128xi1>, vector<1x128xf32>
    %c10_41 = arith.constant 10 : index
    %c0_42 = arith.constant 0 : index
    %77 = vector.load %arg4[%c10_41, %c0_42] : memref<16x128xf32, #tpu.memory_space<vmem>>, vector<1x128xf32>
    tpu.vector_store %arg4[%c10_41, %c0_42], %76 {strides = array<i32>} : memref<16x128xf32, #tpu.memory_space<vmem>>, vector<1x128xf32>,
    %c11 = arith.constant 11 : index
    %78 = memref.load %arg1[%c11] : memref<16xi32, #tpu.memory_space<smem>>
    %79 = vector.broadcast %78 : i32 to vector<1x128xi32>
    %80 = arith.cmpi eq, %0, %79 : vector<1x128xi32>
    %cst_43 = arith.constant 5.65685415 : f32
    %cst_44 = arith.constant 0.000000e+00 : f32
    %81 = vector.broadcast %cst_43 : f32 to vector<1x128xf32>
    %82 = vector.broadcast %cst_44 : f32 to vector<1x128xf32>
    %83 = arith.select %80, %81, %82 : vector<1x128xi1>, vector<1x128xf32>
    %c11_45 = arith.constant 11 : index
    %c0_46 = arith.constant 0 : index
    %84 = vector.load %arg4[%c11_45, %c0_46] : memref<16x128xf32, #tpu.memory_space<vmem>>, vector<1x128xf32>
    tpu.vector_store %arg4[%c11_45, %c0_46], %83 {strides = array<i32>} : memref<16x128xf32, #tpu.memory_space<vmem>>, vector<1x128xf32>,
    %c12 = arith.constant 12 : index
    %85 = memref.load %arg1[%c12] : memref<16xi32, #tpu.memory_space<smem>>
    %86 = vector.broadcast %85 : i32 to vector<1x128xi32>
    %87 = arith.cmpi eq, %0, %86 : vector<1x128xi32>
    %cst_47 = arith.constant 5.65685415 : f32
    %cst_48 = arith.constant 0.000000e+00 : f32
    %88 = vector.broadcast %cst_47 : f32 to vector<1x128xf32>
    %89 = vector.broadcast %cst_48 : f32 to vector<1x128xf32>
    %90 = arith.select %87, %88, %89 : vector<1x128xi1>, vector<1x128xf32>
    %c12_49 = arith.constant 12 : index
    %c0_50 = arith.constant 0 : index
    %91 = vector.load %arg4[%c12_49, %c0_50] : memref<16x128xf32, #tpu.memory_space<vmem>>, vector<1x128xf32>
    tpu.vector_store %arg4[%c12_49, %c0_50], %90 {strides = array<i32>} : memref<16x128xf32, #tpu.memory_space<vmem>>, vector<1x128xf32>,
    %c13 = arith.constant 13 : index
    %92 = memref.load %arg1[%c13] : memref<16xi32, #tpu.memory_space<smem>>
    %93 = vector.broadcast %92 : i32 to vector<1x128xi32>
    %94 = arith.cmpi eq, %0, %93 : vector<1x128xi32>
    %cst_51 = arith.constant 5.65685415 : f32
    %cst_52 = arith.constant 0.000000e+00 : f32
    %95 = vector.broadcast %cst_51 : f32 to vector<1x128xf32>
    %96 = vector.broadcast %cst_52 : f32 to vector<1x128xf32>
    %97 = arith.select %94, %95, %96 : vector<1x128xi1>, vector<1x128xf32>
    %c13_53 = arith.constant 13 : index
    %c0_54 = arith.constant 0 : index
    %98 = vector.load %arg4[%c13_53, %c0_54] : memref<16x128xf32, #tpu.memory_space<vmem>>, vector<1x128xf32>
    tpu.vector_store %arg4[%c13_53, %c0_54], %97 {strides = array<i32>} : memref<16x128xf32, #tpu.memory_space<vmem>>, vector<1x128xf32>,
    %c14 = arith.constant 14 : index
    %99 = memref.load %arg1[%c14] : memref<16xi32, #tpu.memory_space<smem>>
    %100 = vector.broadcast %99 : i32 to vector<1x128xi32>
    %101 = arith.cmpi eq, %0, %100 : vector<1x128xi32>
    %cst_55 = arith.constant 5.65685415 : f32
    %cst_56 = arith.constant 0.000000e+00 : f32
    %102 = vector.broadcast %cst_55 : f32 to vector<1x128xf32>
    %103 = vector.broadcast %cst_56 : f32 to vector<1x128xf32>
    %104 = arith.select %101, %102, %103 : vector<1x128xi1>, vector<1x128xf32>
    %c14_57 = arith.constant 14 : index
    %c0_58 = arith.constant 0 : index
    %105 = vector.load %arg4[%c14_57, %c0_58] : memref<16x128xf32, #tpu.memory_space<vmem>>, vector<1x128xf32>
    tpu.vector_store %arg4[%c14_57, %c0_58], %104 {strides = array<i32>} : memref<16x128xf32, #tpu.memory_space<vmem>>, vector<1x128xf32>,
    %c15 = arith.constant 15 : index
    %106 = memref.load %arg1[%c15] : memref<16xi32, #tpu.memory_space<smem>>
    %107 = vector.broadcast %106 : i32 to vector<1x128xi32>
    %108 = arith.cmpi eq, %0, %107 : vector<1x128xi32>
    %cst_59 = arith.constant 5.65685415 : f32
    %cst_60 = arith.constant 0.000000e+00 : f32
    %109 = vector.broadcast %cst_59 : f32 to vector<1x128xf32>
    %110 = vector.broadcast %cst_60 : f32 to vector<1x128xf32>
    %111 = arith.select %108, %109, %110 : vector<1x128xi1>, vector<1x128xf32>
    %c15_61 = arith.constant 15 : index
    %c0_62 = arith.constant 0 : index
    %112 = vector.load %arg4[%c15_61, %c0_62] : memref<16x128xf32, #tpu.memory_space<vmem>>, vector<1x128xf32>
    tpu.vector_store %arg4[%c15_61, %c0_62], %111 {strides = array<i32>} : memref<16x128xf32, #tpu.memory_space<vmem>>, vector<1x128xf32>,
    %c0_63 = arith.constant 0 : index
    %c0_64 = arith.constant 0 : index
    %113 = vector.load %arg4[%c0_63, %c0_64] : memref<16x128xf32, #tpu.memory_space<vmem>>, vector<16x128xf32>
    %c0_65 = arith.constant 0 : index
    %c0_66 = arith.constant 0 : index
    %114 = vector.load %arg2[%c0_65, %c0_66] : memref<128x32xf32, #tpu.memory_space<vmem>>, vector<128x32xf32>
    %cst_67 = arith.constant dense<0.000000e+00> : vector<16x32xf32>
    %115 = tpu.matmul %113, %114, %cst_67 {dimension_numbers = #tpu.dot_dimension_numbers<[1], [0], [0], [1], [0, 0, 1, 1], [], []>, precision = #tpu.contract_precision<fp32>} : vector<16x128xf32>, vector<128x32xf32>, vector<16x32xf32> -> vector<16x32xf32>
    %c0_68 = arith.constant 0 : index
    %c0_69 = arith.constant 0 : index
    %116 = vector.load %arg3[%c0_68, %c0_69] : memref<16x32xf32, #tpu.memory_space<vmem>>, vector<16x32xf32>
    tpu.vector_store %arg3[%c0_68, %c0_69], %115 {strides = array<i32>} : memref<16x32xf32, #tpu.memory_space<vmem>>, vector<16x32xf32>,
    return
  }
  func.func @transform_0(%arg0: i32, %arg1: memref<16xi32, #tpu.memory_space<smem>>) -> (i32, i32) {
    %c0_i32 = arith.constant 0 : i32
    %c0_i32_0 = arith.constant 0 : i32
    %c0_i32_1 = arith.constant 0 : i32
    return %c0_i32, %c0_i32_0 : i32, i32
  }
  func.func @transform_1(%arg0: i32, %arg1: memref<16xi32, #tpu.memory_space<smem>>) -> (i32, i32) {
    %c0_i32 = arith.constant 0 : i32
    %c0_i32_0 = arith.constant 0 : i32
    %c0_i32_1 = arith.constant 0 : i32
    return %c0_i32, %c0_i32_0 : i32, i32
  }
}

</mosaic_0001>

<llo_original>
// kernel: encoder_forward.1
$region0: #{encoder_forward.1}
  #allocation0 [shape = 'u32[]', space=smem, size = 0x4, offset = 0x4, fixed_abs, tag = 'smem constant byte address 0x4 - core index']
  #allocation1 [shape = 'u32[144,128]{1,0:T(1,128)}', space=vmem, size = 0x12000, scoped, tag = 'internal scratch']
  #allocation2 [shape = 'f32[16,128]{1,0:T(8,128)}', space=vmem, size = 0x2000, scoped, tag = 'scratch operand']
  #allocation3 [shape = 's32[1]{0}', space=sflag, size = 0x4, scoped, tag = 'scoped memory for encoder_forward.1']
  #allocation4 [shape = 'u8[512]{0}', space=smem, size = 0x200, scoped, tag = 'prefetched SMEM operand 0']
  %s0 = inlined_call_operand.vmem [shape: s32[16], index: 0, kind: input, shape index: {}]
  %s1 = inlined_call_operand.vmem [shape: f32[128,32], index: 1, kind: input, shape index: {}]
  %s2 = inlined_call_operand.hbm [shape: f32[16,32], index: 2, kind: output, shape index: {}]
  %s3 = sld [smem:[#allocation0]]
  $region14: #{encoder_forward.1} parent=0
    _
  %s5 = ssub.s32 1, %s3
  %s6 = scalar_select 0, %s5, %s3
  %s7 = sshll.u32 %s0, 4
  %s8 = int_to_ptr.vmem [resolvable:$true] %s7
  %10 = dma.vmem_to_smem %s8, 16, [#allocation4], [#allocation3]
  %11 = dma.done [#allocation3], 16
  %12 = sfence
  $region1: #{encoder_forward.1} parent=0
    #allocation5 [shape = 'u8[8192]{0}', space=vmem, size = 0x2000, scoped, tag = 'output window, operand 0, single buffered']
    #allocation6 [shape = 's32[1]{0}', space=sflag, size = 0x4, scoped, tag = 'scoped memory for encoder_forward.1']
    %13 = vsyncpa [#allocation6], 0
    // Predicated region
    $region2: #{encoder_forward.1} parent=1 // pred_check
      _
    $region3: #{encoder_forward.1} parent=1 // pred_check_branch
      %15 = sbr.rel (0) target = $region5
    $region4: #{encoder_forward.1} parent=1 // pred_region
      _
    $region5: #{encoder_forward.1} parent=1 // pred_fallthru
      _
    %v16 = vlaneseq
    %v17 = vand.u32 %v16, 127
    %s18 = sld [smem:[#allocation4]]
    %v19 = vstv %s18
    %vm20 = vcmp.eq.s32.totalorder %v17, %v19
    %v21 = vsel %vm20, 5.656854, 0.0
    %22 = vst [vmem:[#allocation2] sm:$0x1] %v21
    %s23 = sld [smem:[#allocation4 + $0x1]]
    %v24 = vstv %s23
    %vm25 = vcmp.eq.s32.totalorder %v17, %v24
    %v26 = vsel %vm25, 5.656854, 0.0
    %27 = vst [vmem:[#allocation2 + $0x1] sm:$0x1] %v26
    %s28 = sld [smem:[#allocation4 + $0x2]]
    %v29 = vstv %s28
    %vm30 = vcmp.eq.s32.totalorder %v17, %v29
    %v31 = vsel %vm30, 5.656854, 0.0
    %32 = vst [vmem:[#allocation2 + $0x2] sm:$0x1] %v31
    %s33 = sld [smem:[#allocation4 + $0x3]]
    %v34 = vstv %s33
    %vm35 = vcmp.eq.s32.totalorder %v17, %v34
    %v36 = vsel %vm35, 5.656854, 0.0
    %37 = vst [vmem:[#allocation2 + $0x3] sm:$0x1] %v36
    %s38 = sld [smem:[#allocation4 + $0x4]]
    %v39 = vstv %s38
    %vm40 = vcmp.eq.s32.totalorder %v17, %v39
    %v41 = vsel %vm40, 5.656854, 0.0
    %42 = vst [vmem:[#allocation2 + $0x4] sm:$0x1] %v41
    %s43 = sld [smem:[#allocation4 + $0x5]]
    %v44 = vstv %s43
    %vm45 = vcmp.eq.s32.totalorder %v17, %v44
    %v46 = vsel %vm45, 5.656854, 0.0
    %47 = vst [vmem:[#allocation2 + $0x5] sm:$0x1] %v46
    %s48 = sld [smem:[#allocation4 + $0x6]]
    %v49 = vstv %s48
    %vm50 = vcmp.eq.s32.totalorder %v17, %v49
    %v51 = vsel %vm50, 5.656854, 0.0
    %52 = vst [vmem:[#allocation2 + $0x6] sm:$0x1] %v51
    %s53 = sld [smem:[#allocation4 + $0x7]]
    %v54 = vstv %s53
    %vm55 = vcmp.eq.s32.totalorder %v17, %v54
    %v56 = vsel %vm55, 5.656854, 0.0
    %57 = vst [vmem:[#allocation2 + $0x7] sm:$0x1] %v56
    %s58 = sld [smem:[#allocation4 + $0x8]]
    %v59 = vstv %s58
    %vm60 = vcmp.eq.s32.totalorder %v17, %v59
    %v61 = vsel %vm60, 5.656854, 0.0
    %62 = vst [vmem:[#allocation2 + $0x8] sm:$0x1] %v61
    %s63 = sld [smem:[#allocation4 + $0x9]]
    %v64 = vstv %s63
    %vm65 = vcmp.eq.s32.totalorder %v17, %v64
    %v66 = vsel %vm65, 5.656854, 0.0
    %67 = vst [vmem:[#allocation2 + $0x9] sm:$0x1] %v66
    %s68 = sld [smem:[#allocation4 + $0xa]]
    %v69 = vstv %s68
    %vm70 = vcmp.eq.s32.totalorder %v17, %v69
    %v71 = vsel %vm70, 5.656854, 0.0
    %72 = vst [vmem:[#allocation2 + $0xa] sm:$0x1] %v71
    %s73 = sld [smem:[#allocation4 + $0xb]]
    %v74 = vstv %s73
    %vm75 = vcmp.eq.s32.totalorder %v17, %v74
    %v76 = vsel %vm75, 5.656854, 0.0
    %77 = vst [vmem:[#allocation2 + $0xb] sm:$0x1] %v76
    %s78 = sld [smem:[#allocation4 + $0xc]]
    %v79 = vstv %s78
    %vm80 = vcmp.eq.s32.totalorder %v17, %v79
    %v81 = vsel %vm80, 5.656854, 0.0
    %82 = vst [vmem:[#allocation2 + $0xc] sm:$0x1] %v81
    %s83 = sld [smem:[#allocation4 + $0xd]]
    %v84 = vstv %s83
    %vm85 = vcmp.eq.s32.totalorder %v17, %v84
    %v86 = vsel %vm85, 5.656854, 0.0
    %87 = vst [vmem:[#allocation2 + $0xd] sm:$0x1] %v86
    %s88 = sld [smem:[#allocation4 + $0xe]]
    %v89 = vstv %s88
    %vm90 = vcmp.eq.s32.totalorder %v17, %v89
    %v91 = vsel %vm90, 5.656854, 0.0
    %92 = vst [vmem:[#allocation2 + $0xe] sm:$0x1] %v91
    %s93 = sld [smem:[#allocation4 + $0xf]]
    %v94 = vstv %s93
    %vm95 = vcmp.eq.s32.totalorder %v17, %v94
    %v96 = vsel %vm95, 5.656854, 0.0
    %97 = vst [vmem:[#allocation2 + $0xf] sm:$0x1] %v96
    %v98 = vld [vmem:[#allocation2] sm:$0xff]
    %v99 = vld [vmem:[#allocation2 + $0x8] sm:$0xff]
    %v100 = vld [vmem:[%s1] sm:$0xff]
    %v101 = vld [vmem:[%s1 + $0x8] sm:$0xff]
    %v102 = vld [vmem:[%s1 + $0x10] sm:$0xff]
    %v103 = vld [vmem:[%s1 + $0x18] sm:$0xff]
    %v104 = vld [vmem:[%s1 + $0x20] sm:$0xff]
    %v105 = vld [vmem:[%s1 + $0x28] sm:$0xff]
    %v106 = vld [vmem:[%s1 + $0x30] sm:$0xff]
    %v107 = vld [vmem:[%s1 + $0x38] sm:$0xff]
    %v108 = vld [vmem:[%s1 + $0x40] sm:$0xff]
    %v109 = vld [vmem:[%s1 + $0x48] sm:$0xff]
    %v110 = vld [vmem:[%s1 + $0x50] sm:$0xff]
    %v111 = vld [vmem:[%s1 + $0x58] sm:$0xff]
    %v112 = vld [vmem:[%s1 + $0x60] sm:$0xff]
    %v113 = vld [vmem:[%s1 + $0x68] sm:$0xff]
    %v114 = vld [vmem:[%s1 + $0x70] sm:$0xff]
    %v115 = vld [vmem:[%s1 + $0x78] sm:$0xff]
    %116 = vmatprep.subr.mxu0 0.0
    %v117 = vand.u32 %v115, 4294901760
    %118 = vmatpush1.msra.mxu0 %v117
    %119 = vmatprep.subr.mxu0 0.0
    %v120 = vand.u32 %v114, 4294901760
    %121 = vmatpush1.msra.mxu0 %v120
    %122 = vmatprep.subr.mxu0 0.0
    %v123 = vand.u32 %v113, 4294901760
    %124 = vmatpush1.msra.mxu0 %v123
    %125 = vmatprep.subr.mxu0 0.0
    %v126 = vand.u32 %v112, 4294901760
    %127 = vmatpush1.msra.mxu0 %v126
    %128 = vmatprep.subr.mxu0 0.0
    %v129 = vand.u32 %v111, 4294901760
    %130 = vmatpush1.msra.mxu0 %v129
    %131 = vmatprep.subr.mxu0 0.0
    %v132 = vand.u32 %v110, 4294901760
    %133 = vmatpush1.msra.mxu0 %v132
    %134 = vmatprep.subr.mxu0 0.0
    %v135 = vand.u32 %v109, 4294901760
    %136 = vmatpush1.msra.mxu0 %v135
    %137 = vmatprep.subr.mxu0 0.0
    %v138 = vand.u32 %v108, 4294901760
    %139 = vmatpush1.msra.mxu0 %v138
    %140 = vmatprep.subr.mxu0 0.0
    %v141 = vand.u32 %v107, 4294901760
    %142 = vmatpush1.msra.mxu0 %v141
    %143 = vmatprep.subr.mxu0 0.0
    %v144 = vand.u32 %v106, 4294901760
    %145 = vmatpush1.msra.mxu0 %v144
    %146 = vmatprep.subr.mxu0 0.0
    %v147 = vand.u32 %v105, 4294901760
    %148 = vmatpush1.msra.mxu0 %v147
    %149 = vmatprep.subr.mxu0 0.0
    %v150 = vand.u32 %v104, 4294901760
    %151 = vmatpush1.msra.mxu0 %v150
    %152 = vmatprep.subr.mxu0 0.0
    %v153 = vand.u32 %v103, 4294901760
    %154 = vmatpush1.msra.mxu0 %v153
    %155 = vmatprep.subr.mxu0 0.0
    %v156 = vand.u32 %v102, 4294901760
    %157 = vmatpush1.msra.mxu0 %v156
    %158 = vmatprep.subr.mxu0 0.0
    %v159 = vand.u32 %v101, 4294901760
    %160 = vmatpush1.msra.mxu0 %v159
    %161 = vmatprep.subr.mxu0 0.0
    %v162 = vand.u32 %v100, 4294901760
    %163 = vmatpush1.msra.mxu0 %v162
    %164 = vmatprep.subr.mxu0 0.0
    %165 = vmatpush2.msra.mxu0 0.0
    %166 = vmatprep.subr.mxu0 0.0
    %167 = vmatpush2.msra.mxu0 0.0
    %168 = vmatprep.subr.mxu0 0.0
    %169 = vmatpush2.msra.mxu0 0.0
    %170 = vmatprep.subr.mxu0 0.0
    %171 = vmatpush2.msra.mxu0 0.0
    %172 = vmatprep.subr.mxu0 0.0
    %173 = vmatpush2.msra.mxu0 0.0
    %174 = vmatprep.subr.mxu0 0.0
    %175 = vmatpush2.msra.mxu0 0.0
    %176 = vmatprep.subr.mxu0 0.0
    %177 = vmatpush2.msra.mxu0 0.0
    %178 = vmatprep.subr.mxu0 0.0
    %179 = vmatpush2.msra.mxu0 0.0
    %180 = vmatprep.subr.mxu0 0.0
    %181 = vmatpush2.msra.mxu0 0.0
    %182 = vmatprep.subr.mxu0 0.0
    %183 = vmatpush2.msra.mxu0 0.0
    %184 = vmatprep.subr.mxu0 0.0
    %185 = vmatpush2.msra.mxu0 0.0
    %186 = vmatprep.subr.mxu0 0.0
    %187 = vmatpush2.msra.mxu0 0.0
    %188 = vmatprep.subr.mxu0 0.0
    %189 = vmatpush2.msra.mxu0 0.0
    %190 = vmatprep.subr.mxu0 0.0
    %191 = vmatpush2.msra.mxu0 0.0
    %192 = vmatprep.subr.mxu0 0.0
    %193 = vmatpush2.msra.mxu0 0.0
    %194 = vmatprep.subr.mxu0 0.0
    %195 = vmatpush2.msra.mxu0 0.0
    %196 = vmatprep.mubr.f32.mxu0 0.0
    %v197 = vand.u32 %v98, 4294901760
    %v198 = vsub.f32 %v98, %v197
    %v199 = vand.u32 %v198, 4294901760
    %v200 = vsub.f32 %v198, %v199
    %v201 = vand.u32 %v200, 4294901760
    %202 = vmatmul.mubr.f32.gmra.mxu0 %v201
    %v203 = vpop.f32.mrf.mxu0
    %v204 = vadd.f32 0.0, %v203
    %v205 = vpop.f32.mrf.mxu0
    %206 = vmatprep.mubr.f32.mxu0 0.0
    %v207 = vand.u32 %v99, 4294901760
    %v208 = vsub.f32 %v99, %v207
    %v209 = vand.u32 %v208, 4294901760
    %v210 = vsub.f32 %v208, %v209
    %v211 = vand.u32 %v210, 4294901760
    %212 = vmatmul.mubr.f32.gmra.mxu0 %v211
    %v213 = vpop.f32.mrf.mxu0
    %v214 = vadd.f32 0.0, %v213
    %v215 = vpop.f32.mrf.mxu0
    %216 = vdwg.mxu0
    %217 = vmatprep.subr.mxu0 0.0
    %v218 = vand.u32 %v115, 4294901760
    %v219 = vsub.f32 %v115, %v218
    %v220 = vand.u32 %v219, 4294901760
    %v221 = vsub.f32 %v219, %v220
    %v222 = vand.u32 %v221, 4294901760
    %223 = vmatpush1.msra.mxu0 %v222
    %224 = vmatprep.subr.mxu0 0.0
    %v225 = vand.u32 %v114, 4294901760
    %v226 = vsub.f32 %v114, %v225
    %v227 = vand.u32 %v226, 4294901760
    %v228 = vsub.f32 %v226, %v227
    %v229 = vand.u32 %v228, 4294901760
    %230 = vmatpush1.msra.mxu0 %v229
    %231 = vmatprep.subr.mxu0 0.0
    %v232 = vand.u32 %v113, 4294901760
    %v233 = vsub.f32 %v113, %v232
    %v234 = vand.u32 %v233, 4294901760
    %v235 = vsub.f32 %v233, %v234
    %v236 = vand.u32 %v235, 4294901760
    %237 = vmatpush1.msra.mxu0 %v236
    %238 = vmatprep.subr.mxu0 0.0
    %v239 = vand.u32 %v112, 4294901760
    %v240 = vsub.f32 %v112, %v239
    %v241 = vand.u32 %v240, 4294901760
    %v242 = vsub.f32 %v240, %v241
    %v243 = vand.u32 %v242, 4294901760
    %244 = vmatpush1.msra.mxu0 %v243
    %245 = vmatprep.subr.mxu0 0.0
    %v246 = vand.u32 %v111, 4294901760
    %v247 = vsub.f32 %v111, %v246
    %v248 = vand.u32 %v247, 4294901760
    %v249 = vsub.f32 %v247, %v248
    %v250 = vand.u32 %v249, 4294901760
    %251 = vmatpush1.msra.mxu0 %v250
    %252 = vmatprep.subr.mxu0 0.0
    %v253 = vand.u32 %v110, 4294901760
    %v254 = vsub.f32 %v110, %v253
    %v255 = vand.u32 %v254, 4294901760
    %v256 = vsub.f32 %v254, %v255
    %v257 = vand.u32 %v256, 4294901760
    %258 = vmatpush1.msra.mxu0 %v257
    %259 = vmatprep.subr.mxu0 0.0
    %v260 = vand.u32 %v109, 4294901760
    %v261 = vsub.f32 %v109, %v260
    %v262 = vand.u32 %v261, 4294901760
    %v263 = vsub.f32 %v261, %v262
    %v264 = vand.u32 %v263, 4294901760
    %265 = vmatpush1.msra.mxu0 %v264
    %266 = vmatprep.subr.mxu0 0.0
    %v267 = vand.u32 %v108, 4294901760
    %v268 = vsub.f32 %v108, %v267
    %v269 = vand.u32 %v268, 4294901760
    %v270 = vsub.f32 %v268, %v269
    %v271 = vand.u32 %v270, 4294901760
    %272 = vmatpush1.msra.mxu0 %v271
    %273 = vmatprep.subr.mxu0 0.0
    %v274 = vand.u32 %v107, 4294901760
    %v275 = vsub.f32 %v107, %v274
    %v276 = vand.u32 %v275, 4294901760
    %v277 = vsub.f32 %v275, %v276
    %v278 = vand.u32 %v277, 4294901760
    %279 = vmatpush1.msra.mxu0 %v278
    %280 = vmatprep.subr.mxu0 0.0
    %v281 = vand.u32 %v106, 4294901760
    %v282 = vsub.f32 %v106, %v281
    %v283 = vand.u32 %v282, 4294901760
    %v284 = vsub.f32 %v282, %v283
    %v285 = vand.u32 %v284, 4294901760
    %286 = vmatpush1.msra.mxu0 %v285
    %287 = vmatprep.subr.mxu0 0.0
    %v288 = vand.u32 %v105, 4294901760
    %v289 = vsub.f32 %v105, %v288
    %v290 = vand.u32 %v289, 4294901760
    %v291 = vsub.f32 %v289, %v290
    %v292 = vand.u32 %v291, 4294901760
    %293 = vmatpush1.msra.mxu0 %v292
    %294 = vmatprep.subr.mxu0 0.0
    %v295 = vand.u32 %v104, 4294901760
    %v296 = vsub.f32 %v104, %v295
    %v297 = vand.u32 %v296, 4294901760
    %v298 = vsub.f32 %v296, %v297
    %v299 = vand.u32 %v298, 4294901760
    %300 = vmatpush1.msra.mxu0 %v299
    %301 = vmatprep.subr.mxu0 0.0
    %v302 = vand.u32 %v103, 4294901760
    %v303 = vsub.f32 %v103, %v302
    %v304 = vand.u32 %v303, 4294901760
    %v305 = vsub.f32 %v303, %v304
    %v306 = vand.u32 %v305, 4294901760
    %307 = vmatpush1.msra.mxu0 %v306
    %308 = vmatprep.subr.mxu0 0.0
    %v309 = vand.u32 %v102, 4294901760
    %v310 = vsub.f32 %v102, %v309
    %v311 = vand.u32 %v310, 4294901760
    %v312 = vsub.f32 %v310, %v311
    %v313 = vand.u32 %v312, 4294901760
    %314 = vmatpush1.msra.mxu0 %v313
    %315 = vmatprep.subr.mxu0 0.0
    %v316 = vand.u32 %v101, 4294901760
    %v317 = vsub.f32 %v101, %v316
    %v318 = vand.u32 %v317, 4294901760
    %v319 = vsub.f32 %v317, %v318
    %v320 = vand.u32 %v319, 4294901760
    %321 = vmatpush1.msra.mxu0 %v320
    %322 = vmatprep.subr.mxu0 0.0
    %v323 = vand.u32 %v100, 4294901760
    %v324 = vsub.f32 %v100, %v323
    %v325 = vand.u32 %v324, 4294901760
    %v326 = vsub.f32 %v324, %v325
    %v327 = vand.u32 %v326, 4294901760
    %328 = vmatpush1.msra.mxu0 %v327
    %329 = vmatprep.subr.mxu0 0.0
    %330 = vmatpush2.msra.mxu0 0.0
    %331 = vmatprep.subr.mxu0 0.0
    %332 = vmatpush2.msra.mxu0 0.0
    %333 = vmatprep.subr.mxu0 0.0
    %334 = vmatpush2.msra.mxu0 0.0
    %335 = vmatprep.subr.mxu0 0.0
    %336 = vmatpush2.msra.mxu0 0.0
    %337 = vmatprep.subr.mxu0 0.0
    %338 = vmatpush2.msra.mxu0 0.0
    %339 = vmatprep.subr.mxu0 0.0
    %340 = vmatpush2.msra.mxu0 0.0
    %341 = vmatprep.subr.mxu0 0.0
    %342 = vmatpush2.msra.mxu0 0.0
    %343 = vmatprep.subr.mxu0 0.0
    %344 = vmatpush2.msra.mxu0 0.0
    %345 = vmatprep.subr.mxu0 0.0
    %346 = vmatpush2.msra.mxu0 0.0
    %347 = vmatprep.subr.mxu0 0.0
    %348 = vmatpush2.msra.mxu0 0.0
    %349 = vmatprep.subr.mxu0 0.0
    %350 = vmatpush2.msra.mxu0 0.0
    %351 = vmatprep.subr.mxu0 0.0
    %352 = vmatpush2.msra.mxu0 0.0
    %353 = vmatprep.subr.mxu0 0.0
    %354 = vmatpush2.msra.mxu0 0.0
    %355 = vmatprep.subr.mxu0 0.0
    %356 = vmatpush2.msra.mxu0 0.0
    %357 = vmatprep.subr.mxu0 0.0
    %358 = vmatpush2.msra.mxu0 0.0
    %359 = vmatprep.subr.mxu0 0.0
    %360 = vmatpush2.msra.mxu0 0.0
    %361 = vmatprep.mubr.f32.mxu0 0.0
    %v362 = vand.u32 %v98, 4294901760
    %363 = vmatmul.mubr.f32.gmra.mxu0 %v362
    %v364 = vpop.f32.mrf.mxu0
    %v365 = vadd.f32 %v204, %v364
    %v366 = vpop.f32.mrf.mxu0
    %367 = vmatprep.mubr.f32.mxu0 0.0
    %v368 = vand.u32 %v99, 4294901760
    %369 = vmatmul.mubr.f32.gmra.mxu0 %v368
    %v370 = vpop.f32.mrf.mxu0
    %v371 = vadd.f32 %v214, %v370
    %v372 = vpop.f32.mrf.mxu0
    %373 = vdwg.mxu0
    %374 = vmatprep.subr.mxu0 0.0
    %v375 = vand.u32 %v115, 4294901760
    %v376 = vsub.f32 %v115, %v375
    %377 = vmatpush1.msra.mxu0 %v376
    %378 = vmatprep.subr.mxu0 0.0
    %v379 = vand.u32 %v114, 4294901760
    %v380 = vsub.f32 %v114, %v379
    %381 = vmatpush1.msra.mxu0 %v380
    %382 = vmatprep.subr.mxu0 0.0
    %v383 = vand.u32 %v113, 4294901760
    %v384 = vsub.f32 %v113, %v383
    %385 = vmatpush1.msra.mxu0 %v384
    %386 = vmatprep.subr.mxu0 0.0
    %v387 = vand.u32 %v112, 4294901760
    %v388 = vsub.f32 %v112, %v387
    %389 = vmatpush1.msra.mxu0 %v388
    %390 = vmatprep.subr.mxu0 0.0
    %v391 = vand.u32 %v111, 4294901760
    %v392 = vsub.f32 %v111, %v391
    %393 = vmatpush1.msra.mxu0 %v392
    %394 = vmatprep.subr.mxu0 0.0
    %v395 = vand.u32 %v110, 4294901760
    %v396 = vsub.f32 %v110, %v395
    %397 = vmatpush1.msra.mxu0 %v396
    %398 = vmatprep.subr.mxu0 0.0
    %v399 = vand.u32 %v109, 4294901760
    %v400 = vsub.f32 %v109, %v399
    %401 = vmatpush1.msra.mxu0 %v400
    %402 = vmatprep.subr.mxu0 0.0
    %v403 = vand.u32 %v108, 4294901760
    %v404 = vsub.f32 %v108, %v403
    %405 = vmatpush1.msra.mxu0 %v404
    %406 = vmatprep.subr.mxu0 0.0
    %v407 = vand.u32 %v107, 4294901760
    %v408 = vsub.f32 %v107, %v407
    %409 = vmatpush1.msra.mxu0 %v408
    %410 = vmatprep.subr.mxu0 0.0
    %v411 = vand.u32 %v106, 4294901760
    %v412 = vsub.f32 %v106, %v411
    %413 = vmatpush1.msra.mxu0 %v412
    %414 = vmatprep.subr.mxu0 0.0
    %v415 = vand.u32 %v105, 4294901760
    %v416 = vsub.f32 %v105, %v415
    %417 = vmatpush1.msra.mxu0 %v416
    %418 = vmatprep.subr.mxu0 0.0
    %v419 = vand.u32 %v104, 4294901760
    %v420 = vsub.f32 %v104, %v419
    %421 = vmatpush1.msra.mxu0 %v420
    %422 = vmatprep.subr.mxu0 0.0
    %v423 = vand.u32 %v103, 4294901760
    %v424 = vsub.f32 %v103, %v423
    %425 = vmatpush1.msra.mxu0 %v424
    %426 = vmatprep.subr.mxu0 0.0
    %v427 = vand.u32 %v102, 4294901760
    %v428 = vsub.f32 %v102, %v427
    %429 = vmatpush1.msra.mxu0 %v428
    %430 = vmatprep.subr.mxu0 0.0
    %v431 = vand.u32 %v101, 4294901760
    %v432 = vsub.f32 %v101, %v431
    %433 = vmatpush1.msra.mxu0 %v432
    %434 = vmatprep.subr.mxu0 0.0
    %v435 = vand.u32 %v100, 4294901760
    %v436 = vsub.f32 %v100, %v435
    %437 = vmatpush1.msra.mxu0 %v436
    %438 = vmatprep.subr.mxu0 0.0
    %439 = vmatpush2.msra.mxu0 0.0
    %440 = vmatprep.subr.mxu0 0.0
    %441 = vmatpush2.msra.mxu0 0.0
    %442 = vmatprep.subr.mxu0 0.0
    %443 = vmatpush2.msra.mxu0 0.0
    %444 = vmatprep.subr.mxu0 0.0
    %445 = vmatpush2.msra.mxu0 0.0
    %446 = vmatprep.subr.mxu0 0.0
    %447 = vmatpush2.msra.mxu0 0.0
    %448 = vmatprep.subr.mxu0 0.0
    %449 = vmatpush2.msra.mxu0 0.0
    %450 = vmatprep.subr.mxu0 0.0
    %451 = vmatpush2.msra.mxu0 0.0
    %452 = vmatprep.subr.mxu0 0.0
    %453 = vmatpush2.msra.mxu0 0.0
    %454 = vmatprep.subr.mxu0 0.0
    %455 = vmatpush2.msra.mxu0 0.0
    %456 = vmatprep.subr.mxu0 0.0
    %457 = vmatpush2.msra.mxu0 0.0
    %458 = vmatprep.subr.mxu0 0.0
    %459 = vmatpush2.msra.mxu0 0.0
    %460 = vmatprep.subr.mxu0 0.0
    %461 = vmatpush2.msra.mxu0 0.0
    %462 = vmatprep.subr.mxu0 0.0
    %463 = vmatpush2.msra.mxu0 0.0
    %464 = vmatprep.subr.mxu0 0.0
    %465 = vmatpush2.msra.mxu0 0.0
    %466 = vmatprep.subr.mxu0 0.0
    %467 = vmatpush2.msra.mxu0 0.0
    %468 = vmatprep.subr.mxu0 0.0
    %469 = vmatpush2.msra.mxu0 0.0
    %470 = vmatprep.mubr.f32.mxu0 0.0
    %v471 = vand.u32 %v98, 4294901760
    %v472 = vsub.f32 %v98, %v471
    %473 = vmatmul.mubr.f32.gmra.mxu0 %v472
    %v474 = vpop.f32.mrf.mxu0
    %v475 = vadd.f32 %v365, %v474
    %v476 = vpop.f32.mrf.mxu0
    %477 = vmatprep.mubr.f32.mxu0 0.0
    %v478 = vand.u32 %v99, 4294901760
    %v479 = vsub.f32 %v99, %v478
    %480 = vmatmul.mubr.f32.gmra.mxu0 %v479
    %v481 = vpop.f32.mrf.mxu0
    %v482 = vadd.f32 %v371, %v481
    %v483 = vpop.f32.mrf.mxu0
    %484 = vdwg.mxu0
    %485 = vmatprep.subr.mxu0 0.0
    %v486 = vand.u32 %v115, 4294901760
    %487 = vmatpush1.msra.mxu0 %v486
    %488 = vmatprep.subr.mxu0 0.0
    %v489 = vand.u32 %v114, 4294901760
    %490 = vmatpush1.msra.mxu0 %v489
    %491 = vmatprep.subr.mxu0 0.0
    %v492 = vand.u32 %v113, 4294901760
    %493 = vmatpush1.msra.mxu0 %v492
    %494 = vmatprep.subr.mxu0 0.0
    %v495 = vand.u32 %v112, 4294901760
    %496 = vmatpush1.msra.mxu0 %v495
    %497 = vmatprep.subr.mxu0 0.0
    %v498 = vand.u32 %v111, 4294901760
    %499 = vmatpush1.msra.mxu0 %v498
    %500 = vmatprep.subr.mxu0 0.0
    %v501 = vand.u32 %v110, 4294901760
    %502 = vmatpush1.msra.mxu0 %v501
    %503 = vmatprep.subr.mxu0 0.0
    %v504 = vand.u32 %v109, 4294901760
    %505 = vmatpush1.msra.mxu0 %v504
    %506 = vmatprep.subr.mxu0 0.0
    %v507 = vand.u32 %v108, 4294901760
    %508 = vmatpush1.msra.mxu0 %v507
    %509 = vmatprep.subr.mxu0 0.0
    %v510 = vand.u32 %v107, 4294901760
    %511 = vmatpush1.msra.mxu0 %v510
    %512 = vmatprep.subr.mxu0 0.0
    %v513 = vand.u32 %v106, 4294901760
    %514 = vmatpush1.msra.mxu0 %v513
    %515 = vmatprep.subr.mxu0 0.0
    %v516 = vand.u32 %v105, 4294901760
    %517 = vmatpush1.msra.mxu0 %v516
    %518 = vmatprep.subr.mxu0 0.0
    %v519 = vand.u32 %v104, 4294901760
    %520 = vmatpush1.msra.mxu0 %v519
    %521 = vmatprep.subr.mxu0 0.0
    %v522 = vand.u32 %v103, 4294901760
    %523 = vmatpush1.msra.mxu0 %v522
    %524 = vmatprep.subr.mxu0 0.0
    %v525 = vand.u32 %v102, 4294901760
    %526 = vmatpush1.msra.mxu0 %v525
    %527 = vmatprep.subr.mxu0 0.0
    %v528 = vand.u32 %v101, 4294901760
    %529 = vmatpush1.msra.mxu0 %v528
    %530 = vmatprep.subr.mxu0 0.0
    %v531 = vand.u32 %v100, 4294901760
    %532 = vmatpush1.msra.mxu0 %v531
    %533 = vmatprep.subr.mxu0 0.0
    %534 = vmatpush2.msra.mxu0 0.0
    %535 = vmatprep.subr.mxu0 0.0
    %536 = vmatpush2.msra.mxu0 0.0
    %537 = vmatprep.subr.mxu0 0.0
    %538 = vmatpush2.msra.mxu0 0.0
    %539 = vmatprep.subr.mxu0 0.0
    %540 = vmatpush2.msra.mxu0 0.0
    %541 = vmatprep.subr.mxu0 0.0
    %542 = vmatpush2.msra.mxu0 0.0
    %543 = vmatprep.subr.mxu0 0.0
    %544 = vmatpush2.msra.mxu0 0.0
    %545 = vmatprep.subr.mxu0 0.0
    %546 = vmatpush2.msra.mxu0 0.0
    %547 = vmatprep.subr.mxu0 0.0
    %548 = vmatpush2.msra.mxu0 0.0
    %549 = vmatprep.subr.mxu0 0.0
    %550 = vmatpush2.msra.mxu0 0.0
    %551 = vmatprep.subr.mxu0 0.0
    %552 = vmatpush2.msra.mxu0 0.0
    %553 = vmatprep.subr.mxu0 0.0
    %554 = vmatpush2.msra.mxu0 0.0
    %555 = vmatprep.subr.mxu0 0.0
    %556 = vmatpush2.msra.mxu0 0.0
    %557 = vmatprep.subr.mxu0 0.0
    %558 = vmatpush2.msra.mxu0 0.0
    %559 = vmatprep.subr.mxu0 0.0
    %560 = vmatpush2.msra.mxu0 0.0
    %561 = vmatprep.subr.mxu0 0.0
    %562 = vmatpush2.msra.mxu0 0.0
    %563 = vmatprep.subr.mxu0 0.0
    %564 = vmatpush2.msra.mxu0 0.0
    %565 = vmatprep.mubr.f32.mxu0 0.0
    %v566 = vand.u32 %v98, 4294901760
    %v567 = vsub.f32 %v98, %v566
    %v568 = vand.u32 %v567, 4294901760
    %569 = vmatmul.mubr.f32.gmra.mxu0 %v568
    %v570 = vpop.f32.mrf.mxu0
    %v571 = vadd.f32 %v475, %v570
    %v572 = vpop.f32.mrf.mxu0
    %573 = vmatprep.mubr.f32.mxu0 0.0
    %v574 = vand.u32 %v99, 4294901760
    %v575 = vsub.f32 %v99, %v574
    %v576 = vand.u32 %v575, 4294901760
    %577 = vmatmul.mubr.f32.gmra.mxu0 %v576
    %v578 = vpop.f32.mrf.mxu0
    %v579 = vadd.f32 %v482, %v578
    %v580 = vpop.f32.mrf.mxu0
    %581 = vdwg.mxu0
    %582 = vmatprep.subr.mxu0 0.0
    %v583 = vand.u32 %v115, 4294901760
    %v584 = vsub.f32 %v115, %v583
    %v585 = vand.u32 %v584, 4294901760
    %586 = vmatpush1.msra.mxu0 %v585
    %587 = vmatprep.subr.mxu0 0.0
    %v588 = vand.u32 %v114, 4294901760
    %v589 = vsub.f32 %v114, %v588
    %v590 = vand.u32 %v589, 4294901760
    %591 = vmatpush1.msra.mxu0 %v590
    %592 = vmatprep.subr.mxu0 0.0
    %v593 = vand.u32 %v113, 4294901760
    %v594 = vsub.f32 %v113, %v593
    %v595 = vand.u32 %v594, 4294901760
    %596 = vmatpush1.msra.mxu0 %v595
    %597 = vmatprep.subr.mxu0 0.0
    %v598 = vand.u32 %v112, 4294901760
    %v599 = vsub.f32 %v112, %v598
    %v600 = vand.u32 %v599, 4294901760
    %601 = vmatpush1.msra.mxu0 %v600
    %602 = vmatprep.subr.mxu0 0.0
    %v603 = vand.u32 %v111, 4294901760
    %v604 = vsub.f32 %v111, %v603
    %v605 = vand.u32 %v604, 4294901760
    %606 = vmatpush1.msra.mxu0 %v605
    %607 = vmatprep.subr.mxu0 0.0
    %v608 = vand.u32 %v110, 4294901760
    %v609 = vsub.f32 %v110, %v608
    %v610 = vand.u32 %v609, 4294901760
    %611 = vmatpush1.msra.mxu0 %v610
    %612 = vmatprep.subr.mxu0 0.0
    %v613 = vand.u32 %v109, 4294901760
    %v614 = vsub.f32 %v109, %v613
    %v615 = vand.u32 %v614, 4294901760
    %616 = vmatpush1.msra.mxu0 %v615
    %617 = vmatprep.subr.mxu0 0.0
    %v618 = vand.u32 %v108, 4294901760
    %v619 = vsub.f32 %v108, %v618
    %v620 = vand.u32 %v619, 4294901760
    %621 = vmatpush1.msra.mxu0 %v620
    %622 = vmatprep.subr.mxu0 0.0
    %v623 = vand.u32 %v107, 4294901760
    %v624 = vsub.f32 %v107, %v623
    %v625 = vand.u32 %v624, 4294901760
    %626 = vmatpush1.msra.mxu0 %v625
    %627 = vmatprep.subr.mxu0 0.0
    %v628 = vand.u32 %v106, 4294901760
    %v629 = vsub.f32 %v106, %v628
    %v630 = vand.u32 %v629, 4294901760
    %631 = vmatpush1.msra.mxu0 %v630
    %632 = vmatprep.subr.mxu0 0.0
    %v633 = vand.u32 %v105, 4294901760
    %v634 = vsub.f32 %v105, %v633
    %v635 = vand.u32 %v634, 4294901760
    %636 = vmatpush1.msra.mxu0 %v635
    %637 = vmatprep.subr.mxu0 0.0
    %v638 = vand.u32 %v104, 4294901760
    %v639 = vsub.f32 %v104, %v638
    %v640 = vand.u32 %v639, 4294901760
    %641 = vmatpush1.msra.mxu0 %v640
    %642 = vmatprep.subr.mxu0 0.0
    %v643 = vand.u32 %v103, 4294901760
    %v644 = vsub.f32 %v103, %v643
    %v645 = vand.u32 %v644, 4294901760
    %646 = vmatpush1.msra.mxu0 %v645
    %647 = vmatprep.subr.mxu0 0.0
    %v648 = vand.u32 %v102, 4294901760
    %v649 = vsub.f32 %v102, %v648
    %v650 = vand.u32 %v649, 4294901760
    %651 = vmatpush1.msra.mxu0 %v650
    %652 = vmatprep.subr.mxu0 0.0
    %v653 = vand.u32 %v101, 4294901760
    %v654 = vsub.f32 %v101, %v653
    %v655 = vand.u32 %v654, 4294901760
    %656 = vmatpush1.msra.mxu0 %v655
    %657 = vmatprep.subr.mxu0 0.0
    %v658 = vand.u32 %v100, 4294901760
    %v659 = vsub.f32 %v100, %v658
    %v660 = vand.u32 %v659, 4294901760
    %661 = vmatpush1.msra.mxu0 %v660
    %662 = vmatprep.subr.mxu0 0.0
    %663 = vmatpush2.msra.mxu0 0.0
    %664 = vmatprep.subr.mxu0 0.0
    %665 = vmatpush2.msra.mxu0 0.0
    %666 = vmatprep.subr.mxu0 0.0
    %667 = vmatpush2.msra.mxu0 0.0
    %668 = vmatprep.subr.mxu0 0.0
    %669 = vmatpush2.msra.mxu0 0.0
    %670 = vmatprep.subr.mxu0 0.0
    %671 = vmatpush2.msra.mxu0 0.0
    %672 = vmatprep.subr.mxu0 0.0
    %673 = vmatpush2.msra.mxu0 0.0
    %674 = vmatprep.subr.mxu0 0.0
    %675 = vmatpush2.msra.mxu0 0.0
    %676 = vmatprep.subr.mxu0 0.0
    %677 = vmatpush2.msra.mxu0 0.0
    %678 = vmatprep.subr.mxu0 0.0
    %679 = vmatpush2.msra.mxu0 0.0
    %680 = vmatprep.subr.mxu0 0.0
    %681 = vmatpush2.msra.mxu0 0.0
    %682 = vmatprep.subr.mxu0 0.0
    %683 = vmatpush2.msra.mxu0 0.0
    %684 = vmatprep.subr.mxu0 0.0
    %685 = vmatpush2.msra.mxu0 0.0
    %686 = vmatprep.subr.mxu0 0.0
    %687 = vmatpush2.msra.mxu0 0.0
    %688 = vmatprep.subr.mxu0 0.0
    %689 = vmatpush2.msra.mxu0 0.0
    %690 = vmatprep.subr.mxu0 0.0
    %691 = vmatpush2.msra.mxu0 0.0
    %692 = vmatprep.subr.mxu0 0.0
    %693 = vmatpush2.msra.mxu0 0.0
    %694 = vmatprep.mubr.f32.mxu0 0.0
    %v695 = vand.u32 %v98, 4294901760
    %696 = vmatmul.mubr.f32.gmra.mxu0 %v695
    %v697 = vpop.f32.mrf.mxu0
    %v698 = vadd.f32 %v571, %v697
    %v699 = vpop.f32.mrf.mxu0
    %700 = vmatprep.mubr.f32.mxu0 0.0
    %v701 = vand.u32 %v99, 4294901760
    %702 = vmatmul.mubr.f32.gmra.mxu0 %v701
    %v703 = vpop.f32.mrf.mxu0
    %v704 = vadd.f32 %v579, %v703
    %v705 = vpop.f32.mrf.mxu0
    %706 = vdwg.mxu0
    %707 = vmatprep.subr.mxu0 0.0
    %v708 = vand.u32 %v115, 4294901760
    %709 = vmatpush1.msra.mxu0 %v708
    %710 = vmatprep.subr.mxu0 0.0
    %v711 = vand.u32 %v114, 4294901760
    %712 = vmatpush1.msra.mxu0 %v711
    %713 = vmatprep.subr.mxu0 0.0
    %v714 = vand.u32 %v113, 4294901760
    %715 = vmatpush1.msra.mxu0 %v714
    %716 = vmatprep.subr.mxu0 0.0
    %v717 = vand.u32 %v112, 4294901760
    %718 = vmatpush1.msra.mxu0 %v717
    %719 = vmatprep.subr.mxu0 0.0
    %v720 = vand.u32 %v111, 4294901760
    %721 = vmatpush1.msra.mxu0 %v720
    %722 = vmatprep.subr.mxu0 0.0
    %v723 = vand.u32 %v110, 4294901760
    %724 = vmatpush1.msra.mxu0 %v723
    %725 = vmatprep.subr.mxu0 0.0
    %v726 = vand.u32 %v109, 4294901760
    %727 = vmatpush1.msra.mxu0 %v726
    %728 = vmatprep.subr.mxu0 0.0
    %v729 = vand.u32 %v108, 4294901760
    %730 = vmatpush1.msra.mxu0 %v729
    %731 = vmatprep.subr.mxu0 0.0
    %v732 = vand.u32 %v107, 4294901760
    %733 = vmatpush1.msra.mxu0 %v732
    %734 = vmatprep.subr.mxu0 0.0
    %v735 = vand.u32 %v106, 4294901760
    %736 = vmatpush1.msra.mxu0 %v735
    %737 = vmatprep.subr.mxu0 0.0
    %v738 = vand.u32 %v105, 4294901760
    %739 = vmatpush1.msra.mxu0 %v738
    %740 = vmatprep.subr.mxu0 0.0
    %v741 = vand.u32 %v104, 4294901760
    %742 = vmatpush1.msra.mxu0 %v741
    %743 = vmatprep.subr.mxu0 0.0
    %v744 = vand.u32 %v103, 4294901760
    %745 = vmatpush1.msra.mxu0 %v744
    %746 = vmatprep.subr.mxu0 0.0
    %v747 = vand.u32 %v102, 4294901760
    %748 = vmatpush1.msra.mxu0 %v747
    %749 = vmatprep.subr.mxu0 0.0
    %v750 = vand.u32 %v101, 4294901760
    %751 = vmatpush1.msra.mxu0 %v750
    %752 = vmatprep.subr.mxu0 0.0
    %v753 = vand.u32 %v100, 4294901760
    %754 = vmatpush1.msra.mxu0 %v753
    %755 = vmatprep.subr.mxu0 0.0
    %756 = vmatpush2.msra.mxu0 0.0
    %757 = vmatprep.subr.mxu0 0.0
    %758 = vmatpush2.msra.mxu0 0.0
    %759 = vmatprep.subr.mxu0 0.0
    %760 = vmatpush2.msra.mxu0 0.0
    %761 = vmatprep.subr.mxu0 0.0
    %762 = vmatpush2.msra.mxu0 0.0
    %763 = vmatprep.subr.mxu0 0.0
    %764 = vmatpush2.msra.mxu0 0.0
    %765 = vmatprep.subr.mxu0 0.0
    %766 = vmatpush2.msra.mxu0 0.0
    %767 = vmatprep.subr.mxu0 0.0
    %768 = vmatpush2.msra.mxu0 0.0
    %769 = vmatprep.subr.mxu0 0.0
    %770 = vmatpush2.msra.mxu0 0.0
    %771 = vmatprep.subr.mxu0 0.0
    %772 = vmatpush2.msra.mxu0 0.0
    %773 = vmatprep.subr.mxu0 0.0
    %774 = vmatpush2.msra.mxu0 0.0
    %775 = vmatprep.subr.mxu0 0.0
    %776 = vmatpush2.msra.mxu0 0.0
    %777 = vmatprep.subr.mxu0 0.0
    %778 = vmatpush2.msra.mxu0 0.0
    %779 = vmatprep.subr.mxu0 0.0
    %780 = vmatpush2.msra.mxu0 0.0
    %781 = vmatprep.subr.mxu0 0.0
    %782 = vmatpush2.msra.mxu0 0.0
    %783 = vmatprep.subr.mxu0 0.0
    %784 = vmatpush2.msra.mxu0 0.0
    %785 = vmatprep.subr.mxu0 0.0
    %786 = vmatpush2.msra.mxu0 0.0
    %787 = vmatprep.mubr.f32.mxu0 0.0
    %v788 = vand.u32 %v98, 4294901760
    %789 = vmatmul.mubr.f32.gmra.mxu0 %v788
    %v790 = vpop.f32.mrf.mxu0
    %v791 = vadd.f32 %v698, %v790
    %v792 = vpop.f32.mrf.mxu0
    %793 = vmatprep.mubr.f32.mxu0 0.0
    %v794 = vand.u32 %v99, 4294901760
    %795 = vmatmul.mubr.f32.gmra.mxu0 %v794
    %v796 = vpop.f32.mrf.mxu0
    %v797 = vadd.f32 %v704, %v796
    %v798 = vpop.f32.mrf.mxu0
    %799 = vdwg.mxu0
    %vm800 = vcmask 261120
    %801 = vst.msk [vmem:[#allocation5] sm:$0xff] %vm800, %v791
    %802 = vst.msk [vmem:[#allocation5 + $0x8] sm:$0xff] %vm800, %v797
    // Predicated region
    $region6: #{encoder_forward.1} parent=1 // pred_check
      _
    $region7: #{encoder_forward.1} parent=1 // pred_check_branch
      %804 = sbr.rel (0) target = $region9
    $region8: #{encoder_forward.1} parent=1 // pred_region
      %s806 = ssub.s32 256, 256
      %807 = vsyncadd [#allocation6], %s806
      %s808 = sshll.u32 [#allocation5], 4
      %s809 = int_to_ptr.vmem [resolvable:$true] %s808
      %814 = dma.vmem_to_hbm [thread:$0]  %s809, 256, %s2, [#allocation6], 128, 128, 8
    $region9: #{encoder_forward.1} parent=1 // pred_fallthru
      _
    // Predicated region
    $region10: #{encoder_forward.1} parent=1 // pred_check
      _
    $region11: #{encoder_forward.1} parent=1 // pred_check_branch
      %816 = sbr.rel (0) target = $region13
    $region12: #{encoder_forward.1} parent=1 // pred_region
      %817 = dma.done [#allocation6], 256
    $region13: #{encoder_forward.1} parent=1 // pred_fallthru
      _
    %818 = vsyncpa [#allocation6], 1

</llo_original>
